<compile_context>
chip_gen: v7x
topology: tpu7x:2x2x1
jax: 0.10.0
libtpu: 0.0.40
codegen_flags: <defaults>
</compile_context>

<pallas_src>
import jax
import jax.numpy as jnp
from jax.experimental import pallas as pl
from jax.experimental.pallas import tpu as pltpu

_INV_SQRT2 = 0.7071067811865476
_LN_EPS = 1e-6


def ffn_kernel(x_ref, w1_ref, b1_ref, w2_ref, b2_ref, gamma_ref, beta_ref,
               out_ref, acc_ref):
    k = pl.program_id(1)

    @pl.when(k == 0)
    def _init():
        acc_ref[...] = jnp.zeros_like(acc_ref)

    x = x_ref[...]                                        # (tm, d_in) fp32 residual

    # w_1: bf16 operands on the MXU, fp32 accumulation; bias added in fp32.
    h = jnp.dot(x.astype(jnp.bfloat16), w1_ref[...],
                preferred_element_type=jnp.float32) + b1_ref[...]
    # Exact (erf-based) GELU in fp32, matching PyTorch's F.gelu default.
    h = 0.5 * h * (1.0 + jax.lax.erf(h * _INV_SQRT2))

    # w_2: accumulate partial products over hidden-dim chunks.
    acc_ref[...] += jnp.dot(h.astype(jnp.bfloat16), w2_ref[...],
                            preferred_element_type=jnp.float32)

    @pl.when(k == pl.num_programs(1) - 1)
    def _epilogue():
        # TODO(synk): dropout (p=0.1) is identity in eval mode.
        y = acc_ref[...] + b2_ref[...] + x                # + residual, fp32
        mean = jnp.mean(y, axis=-1, keepdims=True)
        d = y - mean
        var = jnp.mean(d * d, axis=-1, keepdims=True)
        inv = jax.lax.rsqrt(var + _LN_EPS)                # EUP rsqrt
        out_ref[...] = d * (inv * gamma_ref[...]) + beta_ref[...]


def _round_up(v, m):
    return -(-v // m) * m


def _pick_row_tile(rows, row_tile):
    if rows <= 8:
        return rows
    # >= 2 grid steps whenever rows allow, so v7x's two TCs both get work.
    return max(8, min(row_tile, _round_up(rows // 2, 8)))


def _pick_hidden_tile(d_hid, tm, d_in, hid_tile, stream_threshold_bytes):
    # bf16 W1+W2 fully resident + fp32 GELU intermediate.
    resident_bytes = 2 * d_in * d_hid * 2 + tm * d_hid * 4
    if resident_bytes <= stream_threshold_bytes:
        return d_hid
    t = hid_tile
    while t >= 256:
        if d_hid % t == 0:
            return t
        t //= 2
    return d_hid  # ragged d_hid: stay resident rather than risk a masked chunk


def feed_forward_layer(x, params, *, row_tile=256, hid_tile=2048,
                       stream_threshold_bytes=40 << 20):
    """x: (..., d_in) -> (..., d_in).  Fused Linear-GELU-Linear-residual-LayerNorm."""
    orig_shape = x.shape
    d_in = orig_shape[-1]
    d_hid = params["w1"].shape[1]
    rows = x.size // d_in

    x2 = x.reshape(rows, d_in).astype(jnp.float32)
    w1 = params["w1"].astype(jnp.bfloat16)
    w2 = params["w2"].astype(jnp.bfloat16)
    b1 = params["b1"].astype(jnp.float32)
    b2 = params["b2"].astype(jnp.float32)
    gamma = params["gamma"].astype(jnp.float32)
    beta = params["beta"].astype(jnp.float32)

    tm = _pick_row_tile(rows, row_tile)
    tk = _pick_hidden_tile(d_hid, tm, d_in, hid_tile, stream_threshold_bytes)
    grid = (pl.cdiv(rows, tm), pl.cdiv(d_hid, tk))
    resident = grid[1] == 1

    # Fully-resident weight blocks never change -> single buffer; streamed weight
    # tiles keep the default double-buffering so their DMA overlaps compute.
    w_mode = pl.Buffered(1) if resident else None
    const_mode = pl.Buffered(1)
    w_buf = 1 if resident else 2

    # Scoped-VMEM budget: tiles + accumulator + GELU intermediate, with headroom,
    # capped below physical VMEM (64 MiB on v7x, 128 MiB on v5e/v6e).
    est = (
        2 * tm * d_in * 4                  # x tile (double-buffered)
        + 2 * tm * d_in * 4                # out tile (double-buffered)
        + tm * d_in * 4                    # fp32 accumulator scratch
        + w_buf * 2 * d_in * tk * 2        # bf16 W1 / W2 tiles
        + w_buf * tk * 4 + 3 * d_in * 4    # b1, b2, gamma, beta
        + 2 * tm * tk * 4                  # fp32 GELU intermediate + temporaries
    )
    try:
        phys_vmem = pltpu.get_tpu_info().vmem_capacity_bytes
    except Exception:
        phys_vmem = 64 << 20
    vmem_limit = min(int(phys_vmem * 0.9),
                     max(32 << 20, int(est * 1.5) + (4 << 20)))

    out2 = pl.pallas_call(
        ffn_kernel,
        out_shape=jax.ShapeDtypeStruct((rows, d_in), jnp.float32),
        grid=grid,
        in_specs=[
            pl.BlockSpec((tm, d_in), lambda i, k: (i, 0)),
            pl.BlockSpec((d_in, tk), lambda i, k: (0, k), pipeline_mode=w_mode),
            pl.BlockSpec((1, tk), lambda i, k: (0, k), pipeline_mode=w_mode),
            pl.BlockSpec((tk, d_in), lambda i, k: (k, 0), pipeline_mode=w_mode),
            pl.BlockSpec((1, d_in), lambda i, k: (0, 0), pipeline_mode=const_mode),
            pl.BlockSpec((1, d_in), lambda i, k: (0, 0), pipeline_mode=const_mode),
            pl.BlockSpec((1, d_in), lambda i, k: (0, 0), pipeline_mode=const_mode),
        ],
        out_specs=pl.BlockSpec((tm, d_in), lambda i, k: (i, 0)),
        scratch_shapes=[pltpu.VMEM((tm, d_in), jnp.float32)],
        compiler_params=pltpu.CompilerParams(
            dimension_semantics=("parallel", "arbitrary"),
            vmem_limit_bytes=vmem_limit),
    )(x2, w1, b1, w2, b2, gamma, beta)

    return out2.reshape(orig_shape)


def init_params(key, d_in, d_hid):
    k1, k2, k3, k4 = jax.random.split(key, 4)
    s1 = 1.0 / (d_in ** 0.5)
    s2 = 1.0 / (d_hid ** 0.5)
    # Weights stored as (in_features, out_features) == PyTorch Linear's W^T,
    # in bf16 so the MXU is fed natively and weight HBM traffic is halved.
    return {
        "w1": jax.random.uniform(k1, (d_in, d_hid), jnp.float32, -s1, s1
                                 ).astype(jnp.bfloat16),
        "b1": jax.random.uniform(k2, (1, d_hid), jnp.float32, -s1, s1),
        "w2": jax.random.uniform(k3, (d_hid, d_in), jnp.float32, -s2, s2
                                 ).astype(jnp.bfloat16),
        "b2": jax.random.uniform(k4, (1, d_in), jnp.float32, -s2, s2),
        "gamma": jnp.ones((1, d_in), jnp.float32),
        "beta": jnp.zeros((1, d_in), jnp.float32),
    }


def reference_forward(x, params):
    hi = jax.lax.Precision.HIGHEST
    w1 = params["w1"].astype(jnp.float32)
    w2 = params["w2"].astype(jnp.float32)
    residual = x
    h = jnp.matmul(x, w1, precision=hi) + params["b1"]
    h = jax.nn.gelu(h, approximate=False)
    y = jnp.matmul(h, w2, precision=hi) + params["b2"]
    y = y + residual
    mean = jnp.mean(y, axis=-1, keepdims=True)
    var = jnp.mean((y - mean) ** 2, axis=-1, keepdims=True)
    y = (y - mean) / jnp.sqrt(var + 1e-6)
    return y * params["gamma"] + params["beta"]


if __name__ == "__main__":
    batch, seq, d_in, d_hid = 2, 8, 32, 64

    key = jax.random.PRNGKey(0)
    kx, kp = jax.random.split(key, 2)
    x = jax.random.normal(kx, (batch, seq, d_in), jnp.float32)
    params = init_params(kp, d_in, d_hid)

    out = feed_forward_layer(x, params)
    out = jax.block_until_ready(out)

    ref = reference_forward(x, params)
    assert out.shape == (batch, seq, d_in)
    # bf16 MXU operands vs. fp32 HIGHEST-precision reference: loosened tolerance.
    assert jnp.allclose(out, ref, atol=2e-2, rtol=2e-2), float(
        jnp.max(jnp.abs(out - ref)))

    print("KERNEL_OK")
</pallas_src>

<mosaic_0001>
module attributes {stable_mosaic.version = 11 : i64} {
  func.func @ffn_kernel(%arg0: i32, %arg1: i32, %arg2: memref<8x32xf32, #tpu.memory_space<vmem>>, %arg3: memref<32x64xbf16, #tpu.memory_space<vmem>>, %arg4: memref<1x64xf32, #tpu.memory_space<vmem>>, %arg5: memref<64x32xbf16, #tpu.memory_space<vmem>>, %arg6: memref<1x32xf32, #tpu.memory_space<vmem>>, %arg7: memref<1x32xf32, #tpu.memory_space<vmem>>, %arg8: memref<1x32xf32, #tpu.memory_space<vmem>>, %arg9: memref<8x32xf32, #tpu.memory_space<vmem>>, %arg10: memref<8x32xf32, #tpu.memory_space<vmem>>) attributes {dimension_semantics = [#tpu.dimension_semantics<parallel>, #tpu.dimension_semantics<arbitrary>], iteration_bounds = array<i64: 2, 1>, scalar_prefetch = 0 : i64, scratch_operands = 1 : i64, tpu.core_type = #tpu.core_type<tc>, window_params = [{transform_indices = @transform_0, window_bounds = array<i64: 8, 32>}, {pipeline_mode = #tpu.pipeline_mode<synchronous>, transform_indices = @transform_1, window_bounds = array<i64: 32, 64>}, {pipeline_mode = #tpu.pipeline_mode<synchronous>, transform_indices = @transform_2, window_bounds = array<i64: 1, 64>}, {pipeline_mode = #tpu.pipeline_mode<synchronous>, transform_indices = @transform_3, window_bounds = array<i64: 64, 32>}, {pipeline_mode = #tpu.pipeline_mode<synchronous>, transform_indices = @transform_4, window_bounds = array<i64: 1, 32>}, {pipeline_mode = #tpu.pipeline_mode<synchronous>, transform_indices = @transform_5, window_bounds = array<i64: 1, 32>}, {pipeline_mode = #tpu.pipeline_mode<synchronous>, transform_indices = @transform_6, window_bounds = array<i64: 1, 32>}, {transform_indices = @transform_7, window_bounds = array<i64: 8, 32>}]} {
    %c0_i32 = arith.constant 0 : i32
    %0 = arith.cmpi eq, %arg1, %c0_i32 : i32
    %1 = arith.extui %0 : i1 to i32
    %c0_i32_0 = arith.constant 0 : i32
    %2 = arith.cmpi ne, %1, %c0_i32_0 : i32
    scf.if %2 {
      %cst_18 = arith.constant 0.000000e+00 : f32
      %27 = vector.broadcast %cst_18 : f32 to vector<8x32xf32>
      %c0_19 = arith.constant 0 : index
      %c0_20 = arith.constant 0 : index
      %28 = vector.load %arg10[%c0_19, %c0_20] : memref<8x32xf32, #tpu.memory_space<vmem>>, vector<8x32xf32>
      tpu.vector_store %arg10[%c0_19, %c0_20], %27 {strides = array<i32>} : memref<8x32xf32, #tpu.memory_space<vmem>>, vector<8x32xf32>,
    } else {
    }
    %c0 = arith.constant 0 : index
    %c0_1 = arith.constant 0 : index
    %3 = vector.load %arg2[%c0, %c0_1] : memref<8x32xf32, #tpu.memory_space<vmem>>, vector<8x32xf32>
    %4 = arith.truncf %3 : vector<8x32xf32> to vector<8x32xbf16>
    %c0_2 = arith.constant 0 : index
    %c0_3 = arith.constant 0 : index
    %5 = vector.load %arg3[%c0_2, %c0_3] : memref<32x64xbf16, #tpu.memory_space<vmem>>, vector<32x64xbf16>
    %cst = arith.constant dense<0.000000e+00> : vector<8x64xf32>
    %6 = tpu.matmul %4, %5, %cst {dimension_numbers = #tpu.dot_dimension_numbers<[1], [0], [0], [1], [0, 0, 1, 1], [], []>} : vector<8x32xbf16>, vector<32x64xbf16>, vector<8x64xf32> -> vector<8x64xf32>
    %c0_4 = arith.constant 0 : index
    %c0_5 = arith.constant 0 : index
    %7 = vector.load %arg4[%c0_4, %c0_5] : memref<1x64xf32, #tpu.memory_space<vmem>>, vector<1x64xf32>
    %8 = vector.broadcast %7 : vector<1x64xf32> to vector<8x64xf32>
    %9 = arith.addf %6, %8 : vector<8x64xf32>
    %cst_6 = arith.constant 5.000000e-01 : f32
    %10 = vector.broadcast %cst_6 : f32 to vector<8x64xf32>
    %11 = arith.mulf %10, %9 : vector<8x64xf32>
    %cst_7 = arith.constant 0.707106769 : f32
    %12 = vector.broadcast %cst_7 : f32 to vector<8x64xf32>
    %13 = arith.mulf %9, %12 : vector<8x64xf32>
    %14 = math.erf %13 : vector<8x64xf32>
    %cst_8 = arith.constant 1.000000e+00 : f32
    %15 = vector.broadcast %cst_8 : f32 to vector<8x64xf32>
    %16 = arith.addf %15, %14 : vector<8x64xf32>
    %17 = arith.mulf %11, %16 : vector<8x64xf32>
    %c0_9 = arith.constant 0 : index
    %c0_10 = arith.constant 0 : index
    %18 = vector.load %arg10[%c0_9, %c0_10] : memref<8x32xf32, #tpu.memory_space<vmem>>, vector<8x32xf32>
    %19 = arith.truncf %17 : vector<8x64xf32> to vector<8x64xbf16>
    %c0_11 = arith.constant 0 : index
    %c0_12 = arith.constant 0 : index
    %20 = vector.load %arg5[%c0_11, %c0_12] : memref<64x32xbf16, #tpu.memory_space<vmem>>, vector<64x32xbf16>
    %cst_13 = arith.constant dense<0.000000e+00> : vector<8x32xf32>
    %21 = tpu.matmul %19, %20, %cst_13 {dimension_numbers = #tpu.dot_dimension_numbers<[1], [0], [0], [1], [0, 0, 1, 1], [], []>} : vector<8x64xbf16>, vector<64x32xbf16>, vector<8x32xf32> -> vector<8x32xf32>
    %22 = arith.addf %18, %21 : vector<8x32xf32>
    %c0_14 = arith.constant 0 : index
    %c0_15 = arith.constant 0 : index
    %23 = vector.load %arg10[%c0_14, %c0_15] : memref<8x32xf32, #tpu.memory_space<vmem>>, vector<8x32xf32>
    tpu.vector_store %arg10[%c0_14, %c0_15], %22 {strides = array<i32>} : memref<8x32xf32, #tpu.memory_space<vmem>>, vector<8x32xf32>,
    %c0_i32_16 = arith.constant 0 : i32
    %24 = arith.cmpi eq, %arg1, %c0_i32_16 : i32
    %25 = arith.extui %24 : i1 to i32
    %c0_i32_17 = arith.constant 0 : i32
    %26 = arith.cmpi ne, %25, %c0_i32_17 : i32
    scf.if %26 {
      %c0_18 = arith.constant 0 : index
      %c0_19 = arith.constant 0 : index
      %27 = vector.load %arg10[%c0_18, %c0_19] : memref<8x32xf32, #tpu.memory_space<vmem>>, vector<8x32xf32>
      %c0_20 = arith.constant 0 : index
      %c0_21 = arith.constant 0 : index
      %28 = vector.load %arg6[%c0_20, %c0_21] : memref<1x32xf32, #tpu.memory_space<vmem>>, vector<1x32xf32>
      %29 = vector.broadcast %28 : vector<1x32xf32> to vector<8x32xf32>
      %30 = arith.addf %27, %29 : vector<8x32xf32>
      %31 = arith.addf %30, %3 : vector<8x32xf32>
      %cst_22 = arith.constant dense<0.000000e+00> : vector<8xf32>
      %32 = vector.multi_reduction <add>, %31, %cst_22 [1] : vector<8x32xf32> to vector<8xf32>
      %33 = vector.shape_cast %32 : vector<8xf32> to vector<8x1xf32>
      %cst_23 = arith.constant 3.200000e+01 : f32
      %34 = vector.broadcast %cst_23 : f32 to vector<8x1xf32>
      %35 = arith.divf %33, %34 : vector<8x1xf32>
      %36 = vector.broadcast %35 : vector<8x1xf32> to vector<8x32xf32>
      %37 = arith.subf %31, %36 : vector<8x32xf32>
      %38 = arith.mulf %37, %37 : vector<8x32xf32>
      %cst_24 = arith.constant dense<0.000000e+00> : vector<8xf32>
      %39 = vector.multi_reduction <add>, %38, %cst_24 [1] : vector<8x32xf32> to vector<8xf32>
      %40 = vector.shape_cast %39 : vector<8xf32> to vector<8x1xf32>
      %cst_25 = arith.constant 3.200000e+01 : f32
      %41 = vector.broadcast %cst_25 : f32 to vector<8x1xf32>
      %42 = arith.divf %40, %41 : vector<8x1xf32>
      %cst_26 = arith.constant 9.99999997E-7 : f32
      %43 = vector.broadcast %cst_26 : f32 to vector<8x1xf32>
      %44 = arith.addf %42, %43 : vector<8x1xf32>
      %45 = math.rsqrt %44 : vector<8x1xf32>
      %c0_27 = arith.constant 0 : index
      %c0_28 = arith.constant 0 : index
      %46 = vector.load %arg7[%c0_27, %c0_28] : memref<1x32xf32, #tpu.memory_space<vmem>>, vector<1x32xf32>
      %47 = vector.broadcast %45 : vector<8x1xf32> to vector<8x32xf32>
      %48 = vector.broadcast %46 : vector<1x32xf32> to vector<8x32xf32>
      %49 = arith.mulf %47, %48 : vector<8x32xf32>
      %50 = arith.mulf %37, %49 : vector<8x32xf32>
      %c0_29 = arith.constant 0 : index
      %c0_30 = arith.constant 0 : index
      %51 = vector.load %arg8[%c0_29, %c0_30] : memref<1x32xf32, #tpu.memory_space<vmem>>, vector<1x32xf32>
      %52 = vector.broadcast %51 : vector<1x32xf32> to vector<8x32xf32>
      %53 = arith.addf %50, %52 : vector<8x32xf32>
      %c0_31 = arith.constant 0 : index
      %c0_32 = arith.constant 0 : index
      %54 = vector.load %arg9[%c0_31, %c0_32] : memref<8x32xf32, #tpu.memory_space<vmem>>, vector<8x32xf32>
      tpu.vector_store %arg9[%c0_31, %c0_32], %53 {strides = array<i32>} : memref<8x32xf32, #tpu.memory_space<vmem>>, vector<8x32xf32>,
    } else {
    }
    return
  }
  func.func @transform_0(%arg0: i32, %arg1: i32) -> (i32, i32) {
    %c0_i32 = arith.constant 0 : i32
    %c0_i32_0 = arith.constant 0 : i32
    return %arg0, %c0_i32 : i32, i32
  }
  func.func @transform_1(%arg0: i32, %arg1: i32) -> (i32, i32) {
    %c0_i32 = arith.constant 0 : i32
    %c0_i32_0 = arith.constant 0 : i32
    return %c0_i32, %arg1 : i32, i32
  }
  func.func @transform_2(%arg0: i32, %arg1: i32) -> (i32, i32) {
    %c0_i32 = arith.constant 0 : i32
    %c0_i32_0 = arith.constant 0 : i32
    return %c0_i32, %arg1 : i32, i32
  }
  func.func @transform_3(%arg0: i32, %arg1: i32) -> (i32, i32) {
    %c0_i32 = arith.constant 0 : i32
    %c0_i32_0 = arith.constant 0 : i32
    return %arg1, %c0_i32 : i32, i32
  }
  func.func @transform_4(%arg0: i32, %arg1: i32) -> (i32, i32) {
    %c0_i32 = arith.constant 0 : i32
    %c0_i32_0 = arith.constant 0 : i32
    %c0_i32_1 = arith.constant 0 : i32
    return %c0_i32, %c0_i32_0 : i32, i32
  }
  func.func @transform_5(%arg0: i32, %arg1: i32) -> (i32, i32) {
    %c0_i32 = arith.constant 0 : i32
    %c0_i32_0 = arith.constant 0 : i32
    %c0_i32_1 = arith.constant 0 : i32
    return %c0_i32, %c0_i32_0 : i32, i32
  }
  func.func @transform_6(%arg0: i32, %arg1: i32) -> (i32, i32) {
    %c0_i32 = arith.constant 0 : i32
    %c0_i32_0 = arith.constant 0 : i32
    %c0_i32_1 = arith.constant 0 : i32
    return %c0_i32, %c0_i32_0 : i32, i32
  }
  func.func @transform_7(%arg0: i32, %arg1: i32) -> (i32, i32) {
    %c0_i32 = arith.constant 0 : i32
    %c0_i32_0 = arith.constant 0 : i32
    return %arg0, %c0_i32 : i32, i32
  }
}

</mosaic_0001>

<llo_original>
// kernel: tpu_custom_call.1
$region0: #{tpu_custom_call.1}
  #allocation0 [shape = 'u32[]', space=smem, size = 0x4, offset = 0x4, fixed_abs, tag = 'smem constant byte address 0x4 - core index']
  #allocation1 [shape = 'u32[144,128]{1,0:T(1,128)}', space=vmem, size = 0x12000, scoped, tag = 'internal scratch']
  #allocation2 [shape = 'f32[8,32]{1,0:T(8,128)}', space=vmem, size = 0x1000, scoped, tag = 'scratch operand']
  %s0 = inlined_call_operand.vmem [shape: f32[16,32], index: 0, kind: input, shape index: {}]
  %s1 = inlined_call_operand.vmem [shape: bf16[32,64], index: 1, kind: input, shape index: {}]
  %s2 = inlined_call_operand.vmem [shape: f32[1,64], index: 2, kind: input, shape index: {}]
  %s3 = inlined_call_operand.vmem [shape: bf16[64,32], index: 3, kind: input, shape index: {}]
  %s4 = inlined_call_operand.vmem [shape: f32[1,32], index: 4, kind: input, shape index: {}]
  %s5 = inlined_call_operand.vmem [shape: f32[1,32], index: 5, kind: input, shape index: {}]
  %s6 = inlined_call_operand.vmem [shape: f32[1,32], index: 6, kind: input, shape index: {}]
  %s7 = inlined_call_operand.hbm [shape: f32[16,32], index: 7, kind: output, shape index: {}]
  %s8 = sld [smem:[#allocation0]]
  $region69: #{tpu_custom_call.1} parent=0
    _
  %s10 = ssub.s32 1, %s8
  %s11 = scalar_select 0, %s10, %s8
  $region1: #{tpu_custom_call.1} parent=0
    #allocation3 [shape = 'u8[8192]{0}', space=vmem, size = 0x2000, scoped, tag = 'output window, operand 0']
    #allocation4 [shape = 's32[2]{0}', space=sflag, size = 0x8, scoped, tag = 'scoped memory for tpu_custom_call.1']
    %12 = vsyncpa [#allocation4], 0
    %s13 = scalar_lea.sflag [#allocation4], 1
    %14 = vsyncpa %s13, 0
    loop: start=0, step=1, limit=4
    $region2: #{tpu_custom_call.1} parent=1 // loop_pre_header
      _
    $region3: #{tpu_custom_call.1} parent=1 // loop_header
      %s16 = sphi 0, %s20
      %p17 = scmp.ge.s32.totalorder %s16, 4
      %s23 = sphi 0, %s35
      %s24 = sphi 0, %s31
      %s25 = sphi 0, %s23
      %s26 = sphi 0, %s24
      %s27 = sphi 0, %s25
      %s28 = sphi 0, %s26
      %s38 = sphi 0, %s40
      %s41 = sphi 0, %s38
      %s42 = sphi 0, %s41
      %s58 = sphi 0, %s42
      %s64 = sphi 0, %s66
      %s67 = sphi 0, %s64
      %s68 = sphi 0, %s67
      %s84 = sphi 0, %s68
      %s90 = sphi 0, %s92
      %s93 = sphi 0, %s90
      %s94 = sphi 0, %s93
      %s110 = sphi 0, %s94
      %s116 = sphi 0, %s118
      %s119 = sphi 0, %s116
      %s120 = sphi 0, %s119
      %s136 = sphi 0, %s120
      %s140 = sphi 0, %s140
      %s142 = sphi 0, %s140
      %s143 = sphi 0, %s142
      %s157 = sphi 0, %s143
      %s161 = sphi 0, %s161
      %s163 = sphi 0, %s161
      %s164 = sphi 0, %s163
      %s178 = sphi 0, %s164
      %s182 = sphi 0, %s182
      %s184 = sphi 0, %s182
      %s185 = sphi 0, %s184
      %s199 = sphi 0, %s185
      %s205 = sphi 0, %s207
      %s208 = sphi 0, %s205
      %s209 = sphi 0, %s208
      %s225 = sphi 0, %s209
    $region4: #{tpu_custom_call.1} parent=1 // loop_header_branch
      %19 = sbr.rel (%p17) target = $region8
    $region5: #{tpu_custom_call.1} parent=1 // loop_body
      %s21 = ssub.s32 %s16, 1
      %s22 = ssub.s32 %s16, 2
      %s29 = sadd.s32 1, %s24
      %p30 = scmp.ge.s32.totalorder %s29, 1
      %s31 = scalar_select %p30, 0, %s29
      %s32 = sadd.s32 1, %s23
      %s33 = scalar_select %p30, %s32, %s23
      %p34 = scmp.ge.s32.totalorder %s33, 2
      %s35 = scalar_select %p34, 0, %s33
      %s36 = ssub.s32 %s23, %s35
      %p37 = scmp.eq.s32.totalorder %s36, 0
      %s39 = sadd.s32 %s38, 1
      %s40 = scalar_select %p37, %s38, %s39
      %p43 = pneg %p37
      %p44 = scmp.eq.s32.totalorder %s16, 1
      %p45 = por %p43, %p44
      %p46 = scmp.ne.s32.totalorder %s38, %s41
      %p47 = scmp.eq.s32.totalorder %s16, 0
      %p48 = por %p46, %p47
      %p49 = scmp.ne.s32.totalorder %s38, %s41
      %p50 = scmp.eq.s32.totalorder %s21, 1
      %p51 = por %p49, %p50
      %p52 = scmp.ne.s32.totalorder %s41, %s42
      %p53 = scmp.eq.s32.totalorder %s21, 0
      %p54 = por %p52, %p53
      %p55 = scmp.ne.s32.totalorder %s41, %s42
      %p56 = scmp.eq.s32.totalorder %s22, 1
      %p57 = por %p55, %p56
      %p59 = scmp.ne.s32.totalorder %s42, %s58
      %p60 = scmp.eq.s32.totalorder %s22, 0
      %p61 = por %p59, %p60
      %s62 = ssub.s32 %s24, %s31
      %p63 = scmp.eq.s32.totalorder %s62, 0
      %s65 = sadd.s32 %s64, 1
      %s66 = scalar_select %p63, %s64, %s65
      %p69 = pneg %p63
      %p70 = scmp.eq.s32.totalorder %s16, 1
      %p71 = por %p69, %p70
      %p72 = scmp.ne.s32.totalorder %s64, %s67
      %p73 = scmp.eq.s32.totalorder %s16, 0
      %p74 = por %p72, %p73
      %p75 = scmp.ne.s32.totalorder %s64, %s67
      %p76 = scmp.eq.s32.totalorder %s21, 1
      %p77 = por %p75, %p76
      %p78 = scmp.ne.s32.totalorder %s67, %s68
      %p79 = scmp.eq.s32.totalorder %s21, 0
      %p80 = por %p78, %p79
      %p81 = scmp.ne.s32.totalorder %s67, %s68
      %p82 = scmp.eq.s32.totalorder %s22, 1
      %p83 = por %p81, %p82
      %p85 = scmp.ne.s32.totalorder %s68, %s84
      %p86 = scmp.eq.s32.totalorder %s22, 0
      %p87 = por %p85, %p86
      %s88 = ssub.s32 %s24, %s31
      %p89 = scmp.eq.s32.totalorder %s88, 0
      %s91 = sadd.s32 %s90, 1
      %s92 = scalar_select %p89, %s90, %s91
      %p95 = pneg %p89
      %p96 = scmp.eq.s32.totalorder %s16, 1
      %p97 = por %p95, %p96
      %p98 = scmp.ne.s32.totalorder %s90, %s93
      %p99 = scmp.eq.s32.totalorder %s16, 0
      %p100 = por %p98, %p99
      %p101 = scmp.ne.s32.totalorder %s90, %s93
      %p102 = scmp.eq.s32.totalorder %s21, 1
      %p103 = por %p101, %p102
      %p104 = scmp.ne.s32.totalorder %s93, %s94
      %p105 = scmp.eq.s32.totalorder %s21, 0
      %p106 = por %p104, %p105
      %p107 = scmp.ne.s32.totalorder %s93, %s94
      %p108 = scmp.eq.s32.totalorder %s22, 1
      %p109 = por %p107, %p108
      %p111 = scmp.ne.s32.totalorder %s94, %s110
      %p112 = scmp.eq.s32.totalorder %s22, 0
      %p113 = por %p111, %p112
      %s114 = ssub.s32 %s24, %s31
      %p115 = scmp.eq.s32.totalorder %s114, 0
      %s117 = sadd.s32 %s116, 1
      %s118 = scalar_select %p115, %s116, %s117
      %p121 = pneg %p115
      %p122 = scmp.eq.s32.totalorder %s16, 1
      %p123 = por %p121, %p122
      %p124 = scmp.ne.s32.totalorder %s116, %s119
      %p125 = scmp.eq.s32.totalorder %s16, 0
      %p126 = por %p124, %p125
      %p127 = scmp.ne.s32.totalorder %s116, %s119
      %p128 = scmp.eq.s32.totalorder %s21, 1
      %p129 = por %p127, %p128
      %p130 = scmp.ne.s32.totalorder %s119, %s120
      %p131 = scmp.eq.s32.totalorder %s21, 0
      %p132 = por %p130, %p131
      %p133 = scmp.ne.s32.totalorder %s119, %s120
      %p134 = scmp.eq.s32.totalorder %s22, 1
      %p135 = por %p133, %p134
      %p137 = scmp.ne.s32.totalorder %s120, %s136
      %p138 = scmp.eq.s32.totalorder %s22, 0
      %p139 = por %p137, %p138
      %s141 = sadd.s32 %s140, 1
      %p144 = scmp.eq.s32.totalorder %s16, 1
      %p145 = scmp.ne.s32.totalorder %s140, %s142
      %p146 = scmp.eq.s32.totalorder %s16, 0
      %p147 = por %p145, %p146
      %p148 = scmp.ne.s32.totalorder %s140, %s142
      %p149 = scmp.eq.s32.totalorder %s21, 1
      %p150 = por %p148, %p149
      %p151 = scmp.ne.s32.totalorder %s142, %s143
      %p152 = scmp.eq.s32.totalorder %s21, 0
      %p153 = por %p151, %p152
      %p154 = scmp.ne.s32.totalorder %s142, %s143
      %p155 = scmp.eq.s32.totalorder %s22, 1
      %p156 = por %p154, %p155
      %p158 = scmp.ne.s32.totalorder %s143, %s157
      %p159 = scmp.eq.s32.totalorder %s22, 0
      %p160 = por %p158, %p159
      %s162 = sadd.s32 %s161, 1
      %p165 = scmp.eq.s32.totalorder %s16, 1
      %p166 = scmp.ne.s32.totalorder %s161, %s163
      %p167 = scmp.eq.s32.totalorder %s16, 0
      %p168 = por %p166, %p167
      %p169 = scmp.ne.s32.totalorder %s161, %s163
      %p170 = scmp.eq.s32.totalorder %s21, 1
      %p171 = por %p169, %p170
      %p172 = scmp.ne.s32.totalorder %s163, %s164
      %p173 = scmp.eq.s32.totalorder %s21, 0
      %p174 = por %p172, %p173
      %p175 = scmp.ne.s32.totalorder %s163, %s164
      %p176 = scmp.eq.s32.totalorder %s22, 1
      %p177 = por %p175, %p176
      %p179 = scmp.ne.s32.totalorder %s164, %s178
      %p180 = scmp.eq.s32.totalorder %s22, 0
      %p181 = por %p179, %p180
      %s183 = sadd.s32 %s182, 1
      %p186 = scmp.eq.s32.totalorder %s16, 1
      %p187 = scmp.ne.s32.totalorder %s182, %s184
      %p188 = scmp.eq.s32.totalorder %s16, 0
      %p189 = por %p187, %p188
      %p190 = scmp.ne.s32.totalorder %s182, %s184
      %p191 = scmp.eq.s32.totalorder %s21, 1
      %p192 = por %p190, %p191
      %p193 = scmp.ne.s32.totalorder %s184, %s185
      %p194 = scmp.eq.s32.totalorder %s21, 0
      %p195 = por %p193, %p194
      %p196 = scmp.ne.s32.totalorder %s184, %s185
      %p197 = scmp.eq.s32.totalorder %s22, 1
      %p198 = por %p196, %p197
      %p200 = scmp.ne.s32.totalorder %s185, %s199
      %p201 = scmp.eq.s32.totalorder %s22, 0
      %p202 = por %p200, %p201
      %s203 = ssub.s32 %s23, %s35
      %p204 = scmp.eq.s32.totalorder %s203, 0
      %s206 = sadd.s32 %s205, 1
      %s207 = scalar_select %p204, %s205, %s206
      %p210 = pneg %p204
      %p211 = scmp.eq.s32.totalorder %s16, 1
      %p212 = por %p210, %p211
      %p213 = scmp.ne.s32.totalorder %s205, %s208
      %p214 = scmp.eq.s32.totalorder %s16, 0
      %p215 = por %p213, %p214
      %p216 = scmp.ne.s32.totalorder %s205, %s208
      %p217 = scmp.eq.s32.totalorder %s21, 1
      %p218 = por %p216, %p217
      %p219 = scmp.ne.s32.totalorder %s208, %s209
      %p220 = scmp.eq.s32.totalorder %s21, 0
      %p221 = por %p219, %p220
      %p222 = scmp.ne.s32.totalorder %s208, %s209
      %p223 = scmp.eq.s32.totalorder %s22, 1
      %p224 = por %p222, %p223
      %p226 = scmp.ne.s32.totalorder %s209, %s225
      %p227 = scmp.eq.s32.totalorder %s22, 0
      %p228 = por %p226, %p227
      %p229 = scmp.le.s32.totalorder 1, %s16
      %p230 = scmp.lt.s32.totalorder %s16, 3
      %p231 = pnand %p229, %p230
      %p232 = pneg %p231
      // Predicated region
      $region9: #{tpu_custom_call.1} parent=5 // pred_check
        _
      $region10: #{tpu_custom_call.1} parent=5 // pred_check_branch
        %234 = sbr.rel (%p231) target = $region12
      $region11: #{tpu_custom_call.1} parent=5 // pred_region
        %s235 = ssub.s32 %s16, 1
        // Predicated region
        $region13: #{tpu_custom_call.1} parent=11 // pred_check
          %p236 = pneg %p80
        $region14: #{tpu_custom_call.1} parent=11 // pred_check_branch
          %238 = sbr.rel (%p236) target = $region16
        $region15: #{tpu_custom_call.1} parent=11 // pred_region
          %p239 = scmp.lt.s32.totalorder %s26, 0
          %s240 = scalar_select %p239, %s26, 0
          %s241 = smul.addr %s240, 4
          %s242 = scalar_lea.vmem %s1, %s241
        $region16: #{tpu_custom_call.1} parent=11 // pred_fallthru
          _
        // Predicated region
        $region17: #{tpu_custom_call.1} parent=11 // pred_check
          %p243 = pneg %p106
        $region18: #{tpu_custom_call.1} parent=11 // pred_check_branch
          %245 = sbr.rel (%p243) target = $region20
        $region19: #{tpu_custom_call.1} parent=11 // pred_region
          %p246 = scmp.lt.s32.totalorder %s26, 0
          %s247 = scalar_select %p246, %s26, 0
          %s248 = scalar_lea.vmem %s2, %s247
        $region20: #{tpu_custom_call.1} parent=11 // pred_fallthru
          _
        // Predicated region
        $region21: #{tpu_custom_call.1} parent=11 // pred_check
          %p249 = pneg %p132
        $region22: #{tpu_custom_call.1} parent=11 // pred_check_branch
          %251 = sbr.rel (%p249) target = $region24
        $region23: #{tpu_custom_call.1} parent=11 // pred_region
          %s252 = smul.u32 8, %s26
          %p253 = scmp.lt.s32.totalorder %s252, 7
          %s254 = scalar_select %p253, %s252, 7
          %s255 = smul.addr %s254, 4
          %s256 = scalar_lea.vmem %s3, %s255
          %s257 = smul.u32 8, %s26
        $region24: #{tpu_custom_call.1} parent=11 // pred_fallthru
          _
        // Predicated region
        $region25: #{tpu_custom_call.1} parent=11 // pred_check
          %p258 = pneg %p153
        $region26: #{tpu_custom_call.1} parent=11 // pred_check_branch
          %260 = sbr.rel (%p258) target = $region28
        $region27: #{tpu_custom_call.1} parent=11 // pred_region
          _
        $region28: #{tpu_custom_call.1} parent=11 // pred_fallthru
          _
        // Predicated region
        $region29: #{tpu_custom_call.1} parent=11 // pred_check
          %p261 = pneg %p174
        $region30: #{tpu_custom_call.1} parent=11 // pred_check_branch
          %263 = sbr.rel (%p261) target = $region32
        $region31: #{tpu_custom_call.1} parent=11 // pred_region
          _
        $region32: #{tpu_custom_call.1} parent=11 // pred_fallthru
          _
        // Predicated region
        $region33: #{tpu_custom_call.1} parent=11 // pred_check
          %p264 = pneg %p195
        $region34: #{tpu_custom_call.1} parent=11 // pred_check_branch
          %266 = sbr.rel (%p264) target = $region36
        $region35: #{tpu_custom_call.1} parent=11 // pred_region
          _
        $region36: #{tpu_custom_call.1} parent=11 // pred_fallthru
          _
      $region12: #{tpu_custom_call.1} parent=5 // pred_fallthru
        _
      %p267 = scmp.lt.s32.totalorder %s16, 2
      // Predicated region
      $region37: #{tpu_custom_call.1} parent=5 // pred_check
        %p268 = pneg %p267
      $region38: #{tpu_custom_call.1} parent=5 // pred_check_branch
        %270 = sbr.rel (%p268) target = $region40
      $region39: #{tpu_custom_call.1} parent=5 // pred_region
        // Predicated region
        $region41: #{tpu_custom_call.1} parent=39 // pred_check
          %p271 = pneg %p48
        $region42: #{tpu_custom_call.1} parent=39 // pred_check_branch
          %273 = sbr.rel (%p271) target = $region44
        $region43: #{tpu_custom_call.1} parent=39 // pred_region
          %p274 = scmp.lt.s32.totalorder %s23, 1
          %s275 = scalar_select %p274, %s23, 1
          %s276 = smul.addr %s275, 8
          %s277 = scalar_lea.vmem %s0, %s276
        $region44: #{tpu_custom_call.1} parent=39 // pred_fallthru
          _
      $region40: #{tpu_custom_call.1} parent=5 // pred_fallthru
        _
      %p278 = scmp.le.s32.totalorder 1, %s16
      %p279 = scmp.lt.s32.totalorder %s16, 3
      %p280 = pnand %p278, %p279
      %p281 = pneg %p280
      // Predicated region
      $region45: #{tpu_custom_call.1} parent=5 // pred_check
        _
      $region46: #{tpu_custom_call.1} parent=5 // pred_check_branch
        %283 = sbr.rel (%p280) target = $region48
      $region47: #{tpu_custom_call.1} parent=5 // pred_region
        %s284 = ssub.s32 %s16, 1
        %p285 = scmp.lt.s32.totalorder %s25, 1
        %s286 = scalar_select %p285, %s25, 1
        %s287 = smul.addr %s286, 8
        %s288 = scalar_lea.vmem %s0, %s287
        %p289 = pneg %p54
        %p290 = pneg %p51
        %p291 = scmp.lt.s32.totalorder %s26, 0
        %s292 = scalar_select %p291, %s26, 0
        %s293 = smul.addr %s292, 4
        %s294 = scalar_lea.vmem %s1, %s293
        %p295 = pneg %p80
        %p296 = pneg %p77
        %p297 = scmp.lt.s32.totalorder %s26, 0
        %s298 = scalar_select %p297, %s26, 0
        %s299 = scalar_lea.vmem %s2, %s298
        %p300 = pneg %p106
        %p301 = pneg %p103
        %s302 = smul.u32 8, %s26
        %p303 = scmp.lt.s32.totalorder %s302, 7
        %s304 = scalar_select %p303, %s302, 7
        %s305 = smul.addr %s304, 4
        %s306 = scalar_lea.vmem %s3, %s305
        %p307 = pneg %p132
        %p308 = pneg %p129
        %p309 = pneg %p153
        %p310 = pneg %p150
        %p311 = pneg %p174
        %p312 = pneg %p171
        %p313 = pneg %p195
        %p314 = pneg %p192
        %p315 = pneg %p221
        %p316 = pneg %p218
        %s317 = sand.u32 %s208, 1
        %s318 = scalar_lea.sflag [#allocation4], %s317
        %s319 = sand.u32 %s208, 1
        %s320 = smul.addr %s319, 8
        %s321 = scalar_lea.vmem [#allocation3], %s320
        %p322 = scmp.lt.s32.totalorder %s25, 1
        %s323 = scalar_select %p322, %s25, 1
        %s324 = smul.addr %s323, 8
        %s325 = scalar_lea.vmem %s0, %s324
        %p326 = scmp.lt.s32.totalorder %s26, 0
        %s327 = scalar_select %p326, %s26, 0
        %s328 = smul.addr %s327, 4
        %s329 = scalar_lea.vmem %s1, %s328
        %p330 = scmp.lt.s32.totalorder %s26, 0
        %s331 = scalar_select %p330, %s26, 0
        %s332 = scalar_lea.vmem %s2, %s331
        %s333 = smul.u32 8, %s26
        %p334 = scmp.lt.s32.totalorder %s333, 7
        %s335 = scalar_select %p334, %s333, 7
        %s336 = smul.addr %s335, 4
        %s337 = scalar_lea.vmem %s3, %s336
        %s338 = smul.u32 8, %s26
        %p340 = scmp.eq.s32.totalorder %s26, 0
        // Predicated region
        $region49: #{tpu_custom_call.1} parent=47 // pred_check
          %p341 = pneg %p340
        $region50: #{tpu_custom_call.1} parent=47 // pred_check_branch
          %343 = sbr.rel (%p341) target = $region52
        $region51: #{tpu_custom_call.1} parent=47 // pred_region
          %vm344 = vcmask 261120
          %345 = vst.msk [vmem:[#allocation2] sm:$0xff] %vm344, 0.0
        $region52: #{tpu_custom_call.1} parent=47 // pred_fallthru
          _
        %v346 = vld [vmem:[%s325] sm:$0xff]
        %v347 = vpack.c.bf16 %v346, %v346
        %v348 = vld [vmem:[%s329] sm:$0xf]
        %v349 = vld [vmem:[%s329 + $0x4] sm:$0xf]
        %v350 = vld [vmem:[%s329 + $0x8] sm:$0xf]
        %v351 = vld [vmem:[%s329 + $0xc] sm:$0xf]
        %v352 = vld [vmem:[%s332] sm:$0x1]
        %v354 = vlaneseq
        %v355 = vshrl.u32 %v354, 7
        %v356 = vsub.s32 0, %v355
        %v357 = vrot.slane %v352, %v356
        %v363 = vunpack.c.l.b16 %v348
        %v364 = vunpack.c.l.b16 %v349
        %v365 = vunpack.c.l.b16 %v350
        %v366 = vunpack.c.l.b16 %v351
        %v367 = vpack.c.b16 %v364, %v363
        %v368 = vpack.c.b16 %v366, %v365
        %vm371 = vcmask 261120
        %v373 = vsel %vm371, %v347, 0
        %375 = vmatprep.subr.bf16.mxu0 0
        %376 = vmatpush1.bf16.msra.mxu0 %v367
        %377 = vmatprep.subr.bf16.mxu0 0
        %378 = vmatpush1.bf16.msra.mxu0 %v368
        %379 = vmatprep.subr.bf16.mxu0 0
        %380 = vmatpush1.bf16.msra.mxu0 0
        %381 = vmatprep.subr.bf16.mxu0 0
        %382 = vmatpush1.bf16.msra.mxu0 0
        %383 = vmatprep.subr.bf16.mxu0 0
        %384 = vmatpush1.bf16.msra.mxu0 0
        %385 = vmatprep.subr.bf16.mxu0 0
        %386 = vmatpush1.bf16.msra.mxu0 0
        %387 = vmatprep.subr.bf16.mxu0 0
        %388 = vmatpush1.bf16.msra.mxu0 0
        %389 = vmatprep.subr.bf16.mxu0 0
        %390 = vmatpush1.bf16.msra.mxu0 0
        %391 = vmatprep.subr.bf16.mxu0 0
        %392 = vmatpush1.bf16.msra.mxu0 0
        %393 = vmatprep.subr.bf16.mxu0 0
        %394 = vmatpush1.bf16.msra.mxu0 0
        %395 = vmatprep.subr.bf16.mxu0 0
        %396 = vmatpush1.bf16.msra.mxu0 0
        %397 = vmatprep.subr.bf16.mxu0 0
        %398 = vmatpush1.bf16.msra.mxu0 0
        %399 = vmatprep.subr.bf16.mxu0 0
        %400 = vmatpush1.bf16.msra.mxu0 0
        %401 = vmatprep.subr.bf16.mxu0 0
        %402 = vmatpush1.bf16.msra.mxu0 0
        %403 = vmatprep.subr.bf16.mxu0 0
        %404 = vmatpush1.bf16.msra.mxu0 0
        %405 = vmatprep.subr.bf16.mxu0 0
        %406 = vmatpush1.bf16.msra.mxu0 0
        %407 = vmatprep.mubr.bf16.mxu0 0
        %408 = vmatmul.mubr.bf16.gmra.mrb[0].mxu0 %v373
        %v409 = vpop.f32.mrb[0].mxu0
        %v410 = vadd.f32 %v357, %v409
        %v411 = vpop.f32.mrb[0].mxu0
        %v412 = vpop.f32.mrb[0].mxu0
        %v413 = vpop.f32.mrb[0].mxu0
        %414 = vdwg.mxu0
        %v415 = vmul.f32 %v410, 0.5
        %v416 = vmul.f32 %v410, 0.70710677
        %v417 = verf.f32.pop %v416
        %v418 = vadd.f32 %v417, 1.0
        %v419 = vmul.f32 %v415, %v418
        %v420 = vld [vmem:[#allocation2] sm:$0xff]
        %v421 = vpack.c.bf16 %v419, %v419
        %v422 = vld [vmem:[%s337] sm:$0xf]
        %v423 = vld [vmem:[%s337 + $0x4] sm:$0xf]
        %v424 = vld [vmem:[%s337 + $0x8] sm:$0xf]
        %v425 = vld [vmem:[%s337 + $0xc] sm:$0xf]
        %v426 = vld [vmem:[%s337 + $0x10] sm:$0xf]
        %v427 = vld [vmem:[%s337 + $0x14] sm:$0xf]
        %v428 = vld [vmem:[%s337 + $0x18] sm:$0xf]
        %v429 = vld [vmem:[%s337 + $0x1c] sm:$0xf]
        %v438 = vunpack.c.l.b16 %v422
        %v439 = vunpack.c.l.b16 %v423
        %v440 = vunpack.c.l.b16 %v424
        %v441 = vunpack.c.l.b16 %v425
        %v442 = vunpack.c.l.b16 %v426
        %v443 = vunpack.c.l.b16 %v427
        %v444 = vunpack.c.l.b16 %v428
        %v445 = vunpack.c.l.b16 %v429
        %v446 = vpack.c.b16 %v439, %v438
        %v447 = vpack.c.b16 %v441, %v440
        %v448 = vpack.c.b16 %v443, %v442
        %v449 = vpack.c.b16 %v445, %v444
        %vm454 = vcmask 523264
        %v456 = vsel %vm454, %v421, 0
        %458 = vmatprep.subr.bf16.mxu0 0
        %459 = vmatpush1.bf16.msra.mxu0 %v446
        %460 = vmatprep.subr.bf16.mxu0 0
        %461 = vmatpush1.bf16.msra.mxu0 %v447
        %462 = vmatprep.subr.bf16.mxu0 0
        %463 = vmatpush1.bf16.msra.mxu0 %v448
        %464 = vmatprep.subr.bf16.mxu0 0
        %465 = vmatpush1.bf16.msra.mxu0 %v449
        %466 = vmatprep.subr.bf16.mxu0 0
        %467 = vmatpush1.bf16.msra.mxu0 0
        %468 = vmatprep.subr.bf16.mxu0 0
        %469 = vmatpush1.bf16.msra.mxu0 0
        %470 = vmatprep.subr.bf16.mxu0 0
        %471 = vmatpush1.bf16.msra.mxu0 0
        %472 = vmatprep.subr.bf16.mxu0 0
        %473 = vmatpush1.bf16.msra.mxu0 0
        %474 = vmatprep.subr.bf16.mxu0 0
        %475 = vmatpush1.bf16.msra.mxu0 0
        %476 = vmatprep.subr.bf16.mxu0 0
        %477 = vmatpush1.bf16.msra.mxu0 0
        %478 = vmatprep.subr.bf16.mxu0 0
        %479 = vmatpush1.bf16.msra.mxu0 0
        %480 = vmatprep.subr.bf16.mxu0 0
        %481 = vmatpush1.bf16.msra.mxu0 0
        %482 = vmatprep.subr.bf16.mxu0 0
        %483 = vmatpush1.bf16.msra.mxu0 0
        %484 = vmatprep.subr.bf16.mxu0 0
        %485 = vmatpush1.bf16.msra.mxu0 0
        %486 = vmatprep.subr.bf16.mxu0 0
        %487 = vmatpush1.bf16.msra.mxu0 0
        %488 = vmatprep.subr.bf16.mxu0 0
        %489 = vmatpush1.bf16.msra.mxu0 0
        %490 = vmatprep.mubr.bf16.mxu0 0
        %491 = vmatmul.mubr.bf16.gmra.mrb[0].mxu0 %v456
        %v492 = vpop.f32.mrb[0].mxu0
        %v493 = vadd.f32 0.0, %v492
        %v494 = vpop.f32.mrb[0].mxu0
        %v495 = vpop.f32.mrb[0].mxu0
        %v496 = vpop.f32.mrb[0].mxu0
        %497 = vdwg.mxu0
        %v498 = vadd.f32 %v420, %v493
        %499 = vst.msk [vmem:[#allocation2] sm:$0xff] %vm371, %v498
        // Predicated region
        $region53: #{tpu_custom_call.1} parent=47 // pred_check
          %p500 = pneg %p340
        $region54: #{tpu_custom_call.1} parent=47 // pred_check_branch
          %502 = sbr.rel (%p500) target = $region56
        $region55: #{tpu_custom_call.1} parent=47 // pred_region
          %v503 = vld [vmem:[#allocation2] sm:$0xff]
          %v504 = vld [vmem:[%s4] sm:$0x1]
          %v506 = vlaneseq
          %v507 = vshrl.u32 %v506, 7
          %v508 = vsub.s32 0, %v507
          %v509 = vrot.slane %v504, %v508
          %v511 = vadd.f32 %v503, %v509
          %v512 = vadd.f32 %v511, %v346
          %v513 = vsel %vm371, %v512, 0.0
          %514 = vadd.xlane.f32.xlu0 %v513
          %v515 = vpop.xlane.xlu0 %514
          %v516 = vrcp.pop 32.0
          %v517 = vmul.f32 %v515, %v516
          %v518 = vsub.f32 %v512, %v517
          %v519 = vmul.f32 %v518, %v518
          %v520 = vsel %vm371, %v519, 0.0
          %521 = vadd.xlane.f32.xlu0 %v520
          %v522 = vpop.xlane.xlu0 %521
          %v523 = vmul.f32 %v522, %v516
          %v524 = vadd.f32 %v523, 1e-06
          %v525 = vrsqrt.pop %v524
          %v526 = vld [vmem:[%s5] sm:$0x1]
          %v528 = vlaneseq
          %v529 = vshrl.u32 %v528, 7
          %v530 = vsub.s32 0, %v529
          %v531 = vrot.slane %v526, %v530
          %v533 = vmul.f32 %v525, %v531
          %v534 = vmul.f32 %v518, %v533
          %v535 = vld [vmem:[%s6] sm:$0x1]
          %v537 = vlaneseq
          %v538 = vshrl.u32 %v537, 7
          %v539 = vsub.s32 0, %v538
          %v540 = vrot.slane %v535, %v539
          %v542 = vadd.f32 %v534, %v540
          %543 = vst.msk [vmem:[%s321] sm:$0xff] %vm371, %v542
        $region56: #{tpu_custom_call.1} parent=47 // pred_fallthru
          _
        %s544 = sand.u32 %s208, 1
        %s545 = scalar_lea.sflag [#allocation4], %s544
        %s546 = sand.u32 %s208, 1
        %s547 = smul.addr %s546, 8
        %s548 = scalar_lea.vmem [#allocation3], %s547
        // Predicated region
        $region57: #{tpu_custom_call.1} parent=47 // pred_check
          %p549 = pneg %p218
        $region58: #{tpu_custom_call.1} parent=47 // pred_check_branch
          %551 = sbr.rel (%p549) target = $region60
        $region59: #{tpu_custom_call.1} parent=47 // pred_region
          %s553 = ssub.s32 128, 128
          %554 = vsyncadd %s545, %s553
          %s555 = smul.addr %s25, 128
          %s556 = scalar_lea.hbm %s7, %s555
          %s558 = sshll.u32 %s548, 4
          %s559 = int_to_ptr.vmem [resolvable:$true] %s558
          %561 = dma.vmem_to_hbm [thread:$0]  %s559, 128, %s556, %s545
        $region60: #{tpu_custom_call.1} parent=47 // pred_fallthru
          _
      $region48: #{tpu_custom_call.1} parent=5 // pred_fallthru
        _
      %p562 = scmp.le.s32.totalorder 2, %s16
      // Predicated region
      $region61: #{tpu_custom_call.1} parent=5 // pred_check
        %p563 = pneg %p562
      $region62: #{tpu_custom_call.1} parent=5 // pred_check_branch
        %565 = sbr.rel (%p563) target = $region64
      $region63: #{tpu_custom_call.1} parent=5 // pred_region
        %s566 = ssub.s32 %s16, 2
        // Predicated region
        $region65: #{tpu_custom_call.1} parent=63 // pred_check
          %p567 = pneg %p224
        $region66: #{tpu_custom_call.1} parent=63 // pred_check_branch
          %569 = sbr.rel (%p567) target = $region68
        $region67: #{tpu_custom_call.1} parent=63 // pred_region
          %s570 = sand.u32 %s209, 1
          %s571 = scalar_lea.sflag [#allocation4], %s570
          %s572 = sand.u32 %s209, 1
          %s573 = smul.addr %s572, 8
          %s574 = scalar_lea.vmem [#allocation3], %s573
          %575 = dma.done %s571, 128
        $region68: #{tpu_custom_call.1} parent=63 // pred_fallthru
          _
      $region64: #{tpu_custom_call.1} parent=5 // pred_fallthru
        _
    $region6: #{tpu_custom_call.1} parent=1 // loop_footer
      %s20 = sadd.s32 1, %s16
    $region7: #{tpu_custom_call.1} parent=1 // loop_footer_branch
      %15 = sbr.rel target = $region3
    $region8: #{tpu_custom_call.1} parent=1 // loop_exit
      _
    %576 = vsyncpa [#allocation4], 1
    %s577 = scalar_lea.sflag [#allocation4], 1
    %578 = vsyncpa %s577, 1

</llo_original>
